<compile_context>
chip_gen: v7x
topology: tpu7x:2x2x1
jax: 0.10.0
libtpu: 0.0.40
codegen_flags: <defaults>
</compile_context>

<pallas_src>
import functools

import jax
import jax.numpy as jnp
from jax import lax
from jax.experimental import pallas as pl
from jax.experimental.pallas import tpu as pltpu


# ---------------------------------------------------------------------------
# Loss kernel: cross-entropy with label 0 over logits = [l_pos, l_neg] / T,
# streaming the queue in (tile_k, C) tiles.
# ---------------------------------------------------------------------------
def _moco_loss_kernel(q_ref, k_ref, queue_ref, out_ref,
                      qs_sc, lp_sc, m_sc, s_sc,
                      *, inv_temperature, normalized_inputs):
    j = pl.program_id(1)  # queue (K) tile index -- reduction axis

    @pl.when(j == 0)
    def _init():
        qf = q_ref[...].astype(jnp.float32)
        kf = k_ref[...].astype(jnp.float32)
        # Fold 1/T into q once per N tile; reused as the matmul LHS for every
        # queue tile (no per-step scale / downcast of the big logits tile).
        qs_sc[...] = (qf * inv_temperature).astype(qs_sc.dtype)
        lp = jnp.sum(qf * kf, axis=1, keepdims=True) * inv_temperature
        lp_sc[...] = lp
        if normalized_inputs:
            # |logit| <= 1/T for unit-norm rows: fixed softmax max, no rescale.
            s_sc[...] = jnp.exp(lp - inv_temperature)
        else:
            m_sc[...] = lp                                  # running max
            s_sc[...] = jnp.ones(s_sc.shape, s_sc.dtype)    # exp(lp - lp) == 1

    # Negatives tile: bf16 x bf16 on the MXU, f32 accumulate.  Already / T via
    # the pre-scaled q.  (Same contracted-last-dims form as flash attention.)
    ln = lax.dot_general(
        qs_sc[...], queue_ref[...],
        dimension_numbers=(((1,), (1,)), ((), ())),
        preferred_element_type=jnp.float32)                 # (tile_n, tile_k)

    if normalized_inputs:
        s_sc[...] += jnp.sum(jnp.exp(ln - inv_temperature), axis=1,
                             keepdims=True)
    else:
        m_prev = m_sc[...]
        m_new = jnp.maximum(m_prev, jnp.max(ln, axis=1, keepdims=True))
        s_sc[...] = (jnp.exp(m_prev - m_new) * s_sc[...]
                     + jnp.sum(jnp.exp(ln - m_new), axis=1, keepdims=True))
        m_sc[...] = m_new

    @pl.when(j == pl.num_programs(1) - 1)
    def _finalize():
        if normalized_inputs:
            lse = jnp.log(s_sc[...]) + inv_temperature
        else:
            lse = jnp.log(s_sc[...]) + m_sc[...]
        out_ref[...] = lse - lp_sc[...]                     # per-sample loss


def _hw_params():
    """(two_tensorcores, scoped-VMEM budget for tiles, vmem_limit cap)."""
    kind = ''
    try:
        kind = (jax.devices()[0].device_kind or '').lower()
    except Exception:
        pass
    two_tc = ('v7' in kind) or ('v4' in kind) or ('v5p' in kind)
    big_vmem = ('v5' in kind) or ('v6' in kind)       # 128 MiB VMEM parts
    if big_vmem:
        budget, cap = 96 << 20, 112 << 20
    else:                                             # v7x (64 MiB/TC) / unknown
        budget, cap = 40 << 20, 56 << 20
    return two_tc, budget, cap


def moco_nce_loss(q, k, queue_kc, temperature, *, tile_n=None, tile_k=None,
                  normalized_inputs=True):
    n, c = q.shape
    kdim, c2 = queue_kc.shape
    assert c2 == c

    two_tc, vmem_budget, vmem_cap = _hw_params()

    if tile_n is None:
        # 2-TC parts: >= 2 parallel N tiles so both TensorCores run.
        # 1-TC parts: stream the queue from HBM exactly once (tile_n = n).
        tile_n = n // 2 if (two_tc and n % 16 == 0) else n
    assert n % tile_n == 0
    assert tile_n % 8 == 0 or tile_n == n

    q_bytes = jnp.dtype(q.dtype).itemsize
    qu_bytes = jnp.dtype(queue_kc.dtype).itemsize

    def vmem_need(tn, tk):
        return (2 * tk * c * qu_bytes           # queue tile, double-buffered
                + 2 * 2 * tn * c * q_bytes      # q and k tiles, double-buffered
                + 2 * tn * 128 * 4              # (tn, 1) out block, lane-padded
                + tn * c * qu_bytes             # q * (1/T) bf16 scratch
                + 3 * tn * 128 * 4              # lp / m / s scratch, lane-padded
                + 2 * tn * tk * 4)              # f32 logits + exp temporaries

    if tile_k is None:
        cands = sorted(
            {t for t in (kdim, 8192, 4096, 2048, 1024, 512, 256, 128)
             if t <= kdim and kdim % t == 0 and (t % 8 == 0 or t == kdim)},
            reverse=True)
        tile_k = None
        for t in cands:
            if vmem_need(tile_n, t) <= vmem_budget:
                tile_k = t
                break
        if tile_k is None:      # nothing fits the budget: smallest legal tile
            tile_k = cands[-1]
    assert kdim % tile_k == 0
    assert tile_k % 8 == 0 or tile_k == kdim

    grid = (n // tile_n, kdim // tile_k)
    vmem_limit = int(min(max(vmem_need(tile_n, tile_k) * 3 // 2, 32 << 20),
                         vmem_cap))

    kernel = functools.partial(
        _moco_loss_kernel,
        inv_temperature=1.0 / float(temperature),
        normalized_inputs=bool(normalized_inputs))

    per_sample = pl.pallas_call(
        kernel,
        out_shape=jax.ShapeDtypeStruct((n, 1), jnp.float32),
        grid_spec=pltpu.PrefetchScalarGridSpec(
            num_scalar_prefetch=0,
            grid=grid,
            in_specs=[
                pl.BlockSpec((tile_n, c), lambda i, j: (i, 0)),   # q
                pl.BlockSpec((tile_n, c), lambda i, j: (i, 0)),   # k
                pl.BlockSpec((tile_k, c), lambda i, j: (j, 0)),   # queue tile
            ],
            out_specs=pl.BlockSpec((tile_n, 1), lambda i, j: (i, 0)),
            scratch_shapes=[
                pltpu.VMEM((tile_n, c), queue_kc.dtype),  # q * (1/T), bf16
                pltpu.VMEM((tile_n, 1), jnp.float32),     # l_pos / T
                pltpu.VMEM((tile_n, 1), jnp.float32),     # running max
                pltpu.VMEM((tile_n, 1), jnp.float32),     # running sum-exp
            ],
        ),
        compiler_params=pltpu.CompilerParams(
            dimension_semantics=("parallel", "arbitrary"),
            vmem_limit_bytes=vmem_limit,
        ),
    )(q, k, queue_kc)
    # Scalar mean is a tiny XLA reduce; keeps the parallel N axis race-free.
    return jnp.mean(per_sample)


# ---------------------------------------------------------------------------
# Dequeue/enqueue: queue[:, ptr:ptr+bz] = keys.T  (PyTorch layout)
# == rows [ptr, ptr+bz) in our (K, C) layout.  The queue HBM buffer is aliased
# to the output and only the (bz, C) block at block index ptr // bz is written.
# ptr is always a block-aligned multiple of bz (memory_bank_size % bz == 0), so
# the write never wraps -- same contract as the PyTorch module.
# ---------------------------------------------------------------------------
def _enqueue_kernel(ptr_ref, keys_ref, queue_hbm_ref, out_ref):
    del ptr_ref, queue_hbm_ref      # aliased HBM buffer; never DMA'd
    out_ref[...] = keys_ref[...].astype(out_ref.dtype)   # f32 -> bf16 in-kernel


def enqueue_keys(queue_kc, keys, ptr):
    kdim, c = queue_kc.shape
    n, c2 = keys.shape
    assert c2 == c and kdim % n == 0
    assert n % 8 == 0 or n == kdim  # keep the block write sublane-aligned
    ptr_arr = jnp.asarray([ptr], dtype=jnp.int32)
    return pl.pallas_call(
        _enqueue_kernel,
        out_shape=jax.ShapeDtypeStruct((kdim, c), queue_kc.dtype),
        grid_spec=pltpu.PrefetchScalarGridSpec(
            num_scalar_prefetch=1,
            grid=(1,),
            in_specs=[
                pl.BlockSpec((n, c), lambda i, p: (0, 0)),   # keys
                pl.BlockSpec(memory_space=pl.ANY),           # queue (alias only)
            ],
            out_specs=pl.BlockSpec((n, c), lambda i, p: (p[0] // n, 0)),
        ),
        # Inputs are (ptr, keys, queue): alias the full queue buffer (index 2)
        # to output 0 so only the (n, c) block moves through HBM<->VMEM.
        input_output_aliases={2: 0},
    )(ptr_arr, keys, queue_kc)


# ---------------------------------------------------------------------------
# Module wrapper (functional state: the queue array object is replaced each
# call; the enqueue write happens in-place in HBM via buffer aliasing).
# ---------------------------------------------------------------------------
class MoCoNCELossPallas:
    """normalized_inputs=True encodes the MoCo contract that q, k (and hence
    the enqueued queue rows) are L2-normalized, which lets the loss kernel use
    the constant 1/T as the softmax max.  Set False for arbitrary inputs."""

    def __init__(self, config, key, queue_dtype=jnp.bfloat16,
                 loss_tile_n=None, loss_tile_k=None, normalized_inputs=True):
        self.projection_dim = config['projection_dim']
        self.memory_bank_size = config['memory_bank_size']
        self.temperature = config['temperature']
        self.loss_tile_n = loss_tile_n
        self.loss_tile_k = loss_tile_k
        self.normalized_inputs = normalized_inputs
        # Deterministic init mirroring torch.randn + F.normalize(dim=0),
        # then stored as (K, C) bf16.
        queue_ck = jax.random.normal(
            key, (self.projection_dim, self.memory_bank_size), jnp.float32)
        queue_ck = queue_ck / jnp.linalg.norm(queue_ck, axis=0, keepdims=True)
        self.queue = queue_ck.T.astype(queue_dtype)
        self.queue_ptr = 0

    def __call__(self, x):
        q, k = x
        loss = moco_nce_loss(q, k, self.queue, self.temperature,
                             tile_n=self.loss_tile_n, tile_k=self.loss_tile_k,
                             normalized_inputs=self.normalized_inputs)
        bz = k.shape[0]
        assert self.memory_bank_size % bz == 0
        # no_grad buffer update; the old queue buffer is donated to the new one.
        self.queue = enqueue_keys(self.queue, k, self.queue_ptr)
        self.queue_ptr = (self.queue_ptr + bz) % self.memory_bank_size
        return loss


# ---------------------------------------------------------------------------
# Pure-JAX reference.  Uses the same quantization recipe as the kernel (bf16
# queue, q*(1/T) downcast to the queue dtype for the negatives matmul, f32
# accumulate) so the comparison is tight; this is an explicit deviation from
# PyTorch's all-f32 buffer semantics.
# ---------------------------------------------------------------------------
def reference_loss(q, k, queue_kc, temperature):
    inv_t = 1.0 / float(temperature)
    qf = q.astype(jnp.float32)
    kf = k.astype(jnp.float32)
    l_pos = jnp.sum(qf * kf, axis=1, keepdims=True) * inv_t
    q_s = (qf * inv_t).astype(queue_kc.dtype)
    l_neg = lax.dot_general(q_s, queue_kc,
                            dimension_numbers=(((1,), (1,)), ((), ())),
                            preferred_element_type=jnp.float32)
    logits = jnp.concatenate([l_pos, l_neg], axis=1)
    lse = jax.nn.logsumexp(logits, axis=1, keepdims=True)
    return jnp.mean(lse - l_pos)


if __name__ == "__main__":
    config = {'projection_dim': 32, 'memory_bank_size': 512, 'temperature': 0.07}
    batch = 8

    key = jax.random.PRNGKey(0)
    kq, kk_, kqueue = jax.random.split(key, 3)
    q = jax.random.normal(kq, (batch, config['projection_dim']), jnp.float32)
    k = jax.random.normal(kk_, (batch, config['projection_dim']), jnp.float32)
    # MoCo features are L2-normalized.
    q = q / jnp.linalg.norm(q, axis=1, keepdims=True)
    k = k / jnp.linalg.norm(k, axis=1, keepdims=True)

    # tile_k=128 forces 4 queue tiles so the streamed-reduction path is hit.
    module = MoCoNCELossPallas(config, kqueue, loss_tile_k=128)

    # Snapshot the queue BEFORE the call: the enqueue aliases (donates) the
    # queue buffer, so the pre-call array object is consumed.
    queue_init_kc = jnp.copy(module.queue)
    jax.block_until_ready(queue_init_kc)

    loss = module((q, k))
    loss = jax.block_until_ready(loss)

    ref = reference_loss(q, k, queue_init_kc, config['temperature'])
    assert jnp.allclose(loss, ref, rtol=5e-4, atol=5e-4), (loss, ref)

    # Also exercise the general online-softmax path (normalized_inputs=False).
    loss_general = moco_nce_loss(q, k, queue_init_kc, config['temperature'],
                                 tile_k=128, normalized_inputs=False)
    loss_general = jax.block_until_ready(loss_general)
    assert jnp.allclose(loss_general, ref, rtol=5e-4, atol=5e-4), (
        loss_general, ref)

    # Verify the dequeue/enqueue side effect: rows [0, bz) replaced by keys,
    # everything else untouched (same HBM buffer, only one block written).
    expected_queue = queue_init_kc.at[0:batch, :].set(
        k.astype(queue_init_kc.dtype))
    assert jnp.array_equal(module.queue, expected_queue)
    assert module.queue_ptr == batch % config['memory_bank_size']

    print("KERNEL_OK")
</pallas_src>

<mosaic_0001>
module attributes {stable_mosaic.version = 11 : i64} {
  func.func @_moco_loss_kernel(%arg0: i32, %arg1: i32, %arg2: memref<8x32xf32, #tpu.memory_space<vmem>>, %arg3: memref<8x32xf32, #tpu.memory_space<vmem>>, %arg4: memref<128x32xbf16, #tpu.memory_space<vmem>>, %arg5: memref<8x1xf32, #tpu.memory_space<vmem>>, %arg6: memref<8x32xbf16, #tpu.memory_space<vmem>>, %arg7: memref<8x1xf32, #tpu.memory_space<vmem>>, %arg8: memref<8x1xf32, #tpu.memory_space<vmem>>, %arg9: memref<8x1xf32, #tpu.memory_space<vmem>>) attributes {dimension_semantics = [#tpu.dimension_semantics<parallel>, #tpu.dimension_semantics<arbitrary>], iteration_bounds = array<i64: 1, 4>, scalar_prefetch = 0 : i64, scratch_operands = 4 : i64, tpu.core_type = #tpu.core_type<tc>, window_params = [{transform_indices = @transform_0, window_bounds = array<i64: 8, 32>}, {transform_indices = @transform_1, window_bounds = array<i64: 8, 32>}, {transform_indices = @transform_2, window_bounds = array<i64: 128, 32>}, {transform_indices = @transform_3, window_bounds = array<i64: 8, 1>}]} {
    %c0_i32 = arith.constant 0 : i32
    %0 = arith.cmpi eq, %arg1, %c0_i32 : i32
    %1 = arith.extui %0 : i1 to i32
    %c0_i32_0 = arith.constant 0 : i32
    %2 = arith.cmpi ne, %1, %c0_i32_0 : i32
    scf.if %2 {
      %c0_11 = arith.constant 0 : index
      %c0_12 = arith.constant 0 : index
      %17 = vector.load %arg2[%c0_11, %c0_12] : memref<8x32xf32, #tpu.memory_space<vmem>>, vector<8x32xf32>
      %c0_13 = arith.constant 0 : index
      %c0_14 = arith.constant 0 : index
      %18 = vector.load %arg3[%c0_13, %c0_14] : memref<8x32xf32, #tpu.memory_space<vmem>>, vector<8x32xf32>
      %cst_15 = arith.constant 14.2857141 : f32
      %19 = vector.broadcast %cst_15 : f32 to vector<8x32xf32>
      %20 = arith.mulf %17, %19 : vector<8x32xf32>
      %21 = arith.truncf %20 : vector<8x32xf32> to vector<8x32xbf16>
      %c0_16 = arith.constant 0 : index
      %c0_17 = arith.constant 0 : index
      %22 = vector.load %arg6[%c0_16, %c0_17] : memref<8x32xbf16, #tpu.memory_space<vmem>>, vector<8x32xbf16>
      tpu.vector_store %arg6[%c0_16, %c0_17], %21 {strides = array<i32>} : memref<8x32xbf16, #tpu.memory_space<vmem>>, vector<8x32xbf16>,
      %23 = arith.mulf %17, %18 : vector<8x32xf32>
      %cst_18 = arith.constant dense<0.000000e+00> : vector<8xf32>
      %24 = vector.multi_reduction <add>, %23, %cst_18 [1] : vector<8x32xf32> to vector<8xf32>
      %25 = vector.shape_cast %24 : vector<8xf32> to vector<8x1xf32>
      %cst_19 = arith.constant 14.2857141 : f32
      %26 = vector.broadcast %cst_19 : f32 to vector<8x1xf32>
      %27 = arith.mulf %25, %26 : vector<8x1xf32>
      %c0_20 = arith.constant 0 : index
      %c0_21 = arith.constant 0 : index
      %28 = vector.load %arg7[%c0_20, %c0_21] : memref<8x1xf32, #tpu.memory_space<vmem>>, vector<8x1xf32>
      tpu.vector_store %arg7[%c0_20, %c0_21], %27 {strides = array<i32>} : memref<8x1xf32, #tpu.memory_space<vmem>>, vector<8x1xf32>,
      %cst_22 = arith.constant 14.2857141 : f32
      %29 = vector.broadcast %cst_22 : f32 to vector<8x1xf32>
      %30 = arith.subf %27, %29 : vector<8x1xf32>
      %31 = math.exp %30 : vector<8x1xf32>
      %c0_23 = arith.constant 0 : index
      %c0_24 = arith.constant 0 : index
      %32 = vector.load %arg9[%c0_23, %c0_24] : memref<8x1xf32, #tpu.memory_space<vmem>>, vector<8x1xf32>
      tpu.vector_store %arg9[%c0_23, %c0_24], %31 {strides = array<i32>} : memref<8x1xf32, #tpu.memory_space<vmem>>, vector<8x1xf32>,
    } else {
    }
    %c0 = arith.constant 0 : index
    %c0_1 = arith.constant 0 : index
    %3 = vector.load %arg6[%c0, %c0_1] : memref<8x32xbf16, #tpu.memory_space<vmem>>, vector<8x32xbf16>
    %c0_2 = arith.constant 0 : index
    %c0_3 = arith.constant 0 : index
    %4 = vector.load %arg4[%c0_2, %c0_3] : memref<128x32xbf16, #tpu.memory_space<vmem>>, vector<128x32xbf16>
    %cst = arith.constant dense<0.000000e+00> : vector<8x128xf32>
    %5 = tpu.matmul %3, %4, %cst {dimension_numbers = #tpu.dot_dimension_numbers<[1], [1], [0], [0], [0, 0, 1, 0], [], []>} : vector<8x32xbf16>, vector<128x32xbf16>, vector<8x128xf32> -> vector<8x128xf32>
    %c0_4 = arith.constant 0 : index
    %c0_5 = arith.constant 0 : index
    %6 = vector.load %arg9[%c0_4, %c0_5] : memref<8x1xf32, #tpu.memory_space<vmem>>, vector<8x1xf32>
    %cst_6 = arith.constant 14.2857141 : f32
    %7 = vector.broadcast %cst_6 : f32 to vector<8x128xf32>
    %8 = arith.subf %5, %7 : vector<8x128xf32>
    %9 = math.exp %8 : vector<8x128xf32>
    %cst_7 = arith.constant dense<0.000000e+00> : vector<8xf32>
    %10 = vector.multi_reduction <add>, %9, %cst_7 [1] : vector<8x128xf32> to vector<8xf32>
    %11 = vector.shape_cast %10 : vector<8xf32> to vector<8x1xf32>
    %12 = arith.addf %6, %11 : vector<8x1xf32>
    %c0_8 = arith.constant 0 : index
    %c0_9 = arith.constant 0 : index
    %13 = vector.load %arg9[%c0_8, %c0_9] : memref<8x1xf32, #tpu.memory_space<vmem>>, vector<8x1xf32>
    tpu.vector_store %arg9[%c0_8, %c0_9], %12 {strides = array<i32>} : memref<8x1xf32, #tpu.memory_space<vmem>>, vector<8x1xf32>,
    %c3_i32 = arith.constant 3 : i32
    %14 = arith.cmpi eq, %arg1, %c3_i32 : i32
    %15 = arith.extui %14 : i1 to i32
    %c0_i32_10 = arith.constant 0 : i32
    %16 = arith.cmpi ne, %15, %c0_i32_10 : i32
    scf.if %16 {
      %c0_11 = arith.constant 0 : index
      %c0_12 = arith.constant 0 : index
      %17 = vector.load %arg9[%c0_11, %c0_12] : memref<8x1xf32, #tpu.memory_space<vmem>>, vector<8x1xf32>
      %18 = math.log %17 : vector<8x1xf32>
      %cst_13 = arith.constant 14.2857141 : f32
      %19 = vector.broadcast %cst_13 : f32 to vector<8x1xf32>
      %20 = arith.addf %18, %19 : vector<8x1xf32>
      %c0_14 = arith.constant 0 : index
      %c0_15 = arith.constant 0 : index
      %21 = vector.load %arg7[%c0_14, %c0_15] : memref<8x1xf32, #tpu.memory_space<vmem>>, vector<8x1xf32>
      %22 = arith.subf %20, %21 : vector<8x1xf32>
      %c0_16 = arith.constant 0 : index
      %c0_17 = arith.constant 0 : index
      %23 = vector.load %arg5[%c0_16, %c0_17] : memref<8x1xf32, #tpu.memory_space<vmem>>, vector<8x1xf32>
      tpu.vector_store %arg5[%c0_16, %c0_17], %22 {strides = array<i32>} : memref<8x1xf32, #tpu.memory_space<vmem>>, vector<8x1xf32>,
    } else {
    }
    return
  }
  func.func @transform_0(%arg0: i32, %arg1: i32) -> (i32, i32) {
    %c0_i32 = arith.constant 0 : i32
    %c0_i32_0 = arith.constant 0 : i32
    return %arg0, %c0_i32 : i32, i32
  }
  func.func @transform_1(%arg0: i32, %arg1: i32) -> (i32, i32) {
    %c0_i32 = arith.constant 0 : i32
    %c0_i32_0 = arith.constant 0 : i32
    return %arg0, %c0_i32 : i32, i32
  }
  func.func @transform_2(%arg0: i32, %arg1: i32) -> (i32, i32) {
    %c0_i32 = arith.constant 0 : i32
    %c0_i32_0 = arith.constant 0 : i32
    return %arg1, %c0_i32 : i32, i32
  }
  func.func @transform_3(%arg0: i32, %arg1: i32) -> (i32, i32) {
    %c0_i32 = arith.constant 0 : i32
    %c0_i32_0 = arith.constant 0 : i32
    return %arg0, %c0_i32 : i32, i32
  }
}

</mosaic_0001>

<llo_original>
// kernel: tpu_custom_call.1
$region0: #{tpu_custom_call.1}
  #allocation0 [shape = 'u32[]', space=smem, size = 0x4, offset = 0x4, fixed_abs, tag = 'smem constant byte address 0x4 - core index']
  #allocation1 [shape = 'u32[144,128]{1,0:T(1,128)}', space=vmem, size = 0x12000, scoped, tag = 'internal scratch']
  #allocation2 [shape = 'bf16[8,32]{1,0:T(8,128)(2,1)}', space=vmem, size = 0x800, scoped, tag = 'scratch operand']
  #allocation3 [shape = 'f32[8,1]{1,0:T(8,128)}', space=vmem, size = 0x1000, scoped, tag = 'scratch operand']
  #allocation4 [shape = 'f32[8,1]{1,0:T(8,128)}', space=vmem, size = 0x1000, scoped, tag = 'scratch operand']
  #allocation5 [shape = 'f32[8,1]{1,0:T(8,128)}', space=vmem, size = 0x1000, scoped, tag = 'scratch operand']
  %s0 = inlined_call_operand.vmem [shape: f32[8,32], index: 0, kind: input, shape index: {}]
  %s1 = inlined_call_operand.vmem [shape: f32[8,32], index: 1, kind: input, shape index: {}]
  %s2 = inlined_call_operand.vmem [shape: bf16[512,32], index: 2, kind: input, shape index: {}]
  %s3 = inlined_call_operand.vmem [shape: f32[8,1], index: 3, kind: output, shape index: {}]
  %s4 = sld [smem:[#allocation0]]
  $region53: #{tpu_custom_call.1} parent=0
    _
  %s6 = ssub.s32 1, %s4
  %s7 = scalar_select 0, %s6, %s4
  loop: start=0, step=1, limit=6
  $region2: #{tpu_custom_call.1} parent=0 // loop_pre_header
    _
  $region3: #{tpu_custom_call.1} parent=0 // loop_header
    %s9 = sphi 0, %s13
    %p10 = scmp.ge.s32.totalorder %s9, 6
    %s16 = sphi 0, %s28
    %s17 = sphi 0, %s24
    %s18 = sphi 0, %s16
    %s19 = sphi 0, %s17
    %s20 = sphi 0, %s18
    %s21 = sphi 0, %s19
    %s31 = sphi 0, %s33
    %s34 = sphi 0, %s31
    %s35 = sphi 0, %s34
    %s51 = sphi 0, %s35
    %s57 = sphi 0, %s59
    %s60 = sphi 0, %s57
    %s61 = sphi 0, %s60
    %s77 = sphi 0, %s61
    %s83 = sphi 0, %s85
    %s86 = sphi 0, %s83
    %s87 = sphi 0, %s86
    %s103 = sphi 0, %s87
    %s109 = sphi 0, %s111
    %s112 = sphi 0, %s109
    %s113 = sphi 0, %s112
    %s129 = sphi 0, %s113
  $region4: #{tpu_custom_call.1} parent=0 // loop_header_branch
    %12 = sbr.rel (%p10) target = $region8
  $region5: #{tpu_custom_call.1} parent=0 // loop_body
    %s14 = ssub.s32 %s9, 1
    %s15 = ssub.s32 %s9, 2
    %s22 = sadd.s32 1, %s17
    %p23 = scmp.ge.s32.totalorder %s22, 4
    %s24 = scalar_select %p23, 0, %s22
    %s25 = sadd.s32 1, %s16
    %s26 = scalar_select %p23, %s25, %s16
    %p27 = scmp.ge.s32.totalorder %s26, 1
    %s28 = scalar_select %p27, 0, %s26
    %s29 = ssub.s32 %s16, %s28
    %p30 = scmp.eq.s32.totalorder %s29, 0
    %s32 = sadd.s32 %s31, 1
    %s33 = scalar_select %p30, %s31, %s32
    %p36 = pneg %p30
    %p37 = scmp.eq.s32.totalorder %s9, 3
    %p38 = por %p36, %p37
    %p39 = scmp.ne.s32.totalorder %s31, %s34
    %p40 = scmp.eq.s32.totalorder %s9, 0
    %p41 = por %p39, %p40
    %p42 = scmp.ne.s32.totalorder %s31, %s34
    %p43 = scmp.eq.s32.totalorder %s14, 3
    %p44 = por %p42, %p43
    %p45 = scmp.ne.s32.totalorder %s34, %s35
    %p46 = scmp.eq.s32.totalorder %s14, 0
    %p47 = por %p45, %p46
    %p48 = scmp.ne.s32.totalorder %s34, %s35
    %p49 = scmp.eq.s32.totalorder %s15, 3
    %p50 = por %p48, %p49
    %p52 = scmp.ne.s32.totalorder %s35, %s51
    %p53 = scmp.eq.s32.totalorder %s15, 0
    %p54 = por %p52, %p53
    %s55 = ssub.s32 %s16, %s28
    %p56 = scmp.eq.s32.totalorder %s55, 0
    %s58 = sadd.s32 %s57, 1
    %s59 = scalar_select %p56, %s57, %s58
    %p62 = pneg %p56
    %p63 = scmp.eq.s32.totalorder %s9, 3
    %p64 = por %p62, %p63
    %p65 = scmp.ne.s32.totalorder %s57, %s60
    %p66 = scmp.eq.s32.totalorder %s9, 0
    %p67 = por %p65, %p66
    %p68 = scmp.ne.s32.totalorder %s57, %s60
    %p69 = scmp.eq.s32.totalorder %s14, 3
    %p70 = por %p68, %p69
    %p71 = scmp.ne.s32.totalorder %s60, %s61
    %p72 = scmp.eq.s32.totalorder %s14, 0
    %p73 = por %p71, %p72
    %p74 = scmp.ne.s32.totalorder %s60, %s61
    %p75 = scmp.eq.s32.totalorder %s15, 3
    %p76 = por %p74, %p75
    %p78 = scmp.ne.s32.totalorder %s61, %s77
    %p79 = scmp.eq.s32.totalorder %s15, 0
    %p80 = por %p78, %p79
    %s81 = ssub.s32 %s17, %s24
    %p82 = scmp.eq.s32.totalorder %s81, 0
    %s84 = sadd.s32 %s83, 1
    %s85 = scalar_select %p82, %s83, %s84
    %p88 = pneg %p82
    %p89 = scmp.eq.s32.totalorder %s9, 3
    %p90 = por %p88, %p89
    %p91 = scmp.ne.s32.totalorder %s83, %s86
    %p92 = scmp.eq.s32.totalorder %s9, 0
    %p93 = por %p91, %p92
    %p94 = scmp.ne.s32.totalorder %s83, %s86
    %p95 = scmp.eq.s32.totalorder %s14, 3
    %p96 = por %p94, %p95
    %p97 = scmp.ne.s32.totalorder %s86, %s87
    %p98 = scmp.eq.s32.totalorder %s14, 0
    %p99 = por %p97, %p98
    %p100 = scmp.ne.s32.totalorder %s86, %s87
    %p101 = scmp.eq.s32.totalorder %s15, 3
    %p102 = por %p100, %p101
    %p104 = scmp.ne.s32.totalorder %s87, %s103
    %p105 = scmp.eq.s32.totalorder %s15, 0
    %p106 = por %p104, %p105
    %s107 = ssub.s32 %s16, %s28
    %p108 = scmp.eq.s32.totalorder %s107, 0
    %s110 = sadd.s32 %s109, 1
    %s111 = scalar_select %p108, %s109, %s110
    %p114 = pneg %p108
    %p115 = scmp.eq.s32.totalorder %s9, 3
    %p116 = por %p114, %p115
    %p117 = scmp.ne.s32.totalorder %s109, %s112
    %p118 = scmp.eq.s32.totalorder %s9, 0
    %p119 = por %p117, %p118
    %p120 = scmp.ne.s32.totalorder %s109, %s112
    %p121 = scmp.eq.s32.totalorder %s14, 3
    %p122 = por %p120, %p121
    %p123 = scmp.ne.s32.totalorder %s112, %s113
    %p124 = scmp.eq.s32.totalorder %s14, 0
    %p125 = por %p123, %p124
    %p126 = scmp.ne.s32.totalorder %s112, %s113
    %p127 = scmp.eq.s32.totalorder %s15, 3
    %p128 = por %p126, %p127
    %p130 = scmp.ne.s32.totalorder %s113, %s129
    %p131 = scmp.eq.s32.totalorder %s15, 0
    %p132 = por %p130, %p131
    %p133 = scmp.le.s32.totalorder 1, %s9
    %p134 = scmp.lt.s32.totalorder %s9, 5
    %p135 = pnand %p133, %p134
    %p136 = pneg %p135
    // Predicated region
    $region9: #{tpu_custom_call.1} parent=5 // pred_check
      _
    $region10: #{tpu_custom_call.1} parent=5 // pred_check_branch
      %138 = sbr.rel (%p135) target = $region12
    $region11: #{tpu_custom_call.1} parent=5 // pred_region
      %s139 = ssub.s32 %s9, 1
      // Predicated region
      $region13: #{tpu_custom_call.1} parent=11 // pred_check
        %p140 = pneg %p47
      $region14: #{tpu_custom_call.1} parent=11 // pred_check_branch
        %142 = sbr.rel (%p140) target = $region16
      $region15: #{tpu_custom_call.1} parent=11 // pred_region
        %p143 = scmp.lt.s32.totalorder %s18, 0
        %s144 = scalar_select %p143, %s18, 0
        %s145 = smul.addr %s144, 8
        %s146 = scalar_lea.vmem %s0, %s145
      $region16: #{tpu_custom_call.1} parent=11 // pred_fallthru
        _
      // Predicated region
      $region17: #{tpu_custom_call.1} parent=11 // pred_check
        %p147 = pneg %p73
      $region18: #{tpu_custom_call.1} parent=11 // pred_check_branch
        %149 = sbr.rel (%p147) target = $region20
      $region19: #{tpu_custom_call.1} parent=11 // pred_region
        %p150 = scmp.lt.s32.totalorder %s18, 0
        %s151 = scalar_select %p150, %s18, 0
        %s152 = smul.addr %s151, 8
        %s153 = scalar_lea.vmem %s1, %s152
      $region20: #{tpu_custom_call.1} parent=11 // pred_fallthru
        _
    $region12: #{tpu_custom_call.1} parent=5 // pred_fallthru
      _
    %p154 = scmp.lt.s32.totalorder %s9, 4
    // Predicated region
    $region21: #{tpu_custom_call.1} parent=5 // pred_check
      %p155 = pneg %p154
    $region22: #{tpu_custom_call.1} parent=5 // pred_check_branch
      %157 = sbr.rel (%p155) target = $region24
    $region23: #{tpu_custom_call.1} parent=5 // pred_region
      // Predicated region
      $region25: #{tpu_custom_call.1} parent=23 // pred_check
        %p158 = pneg %p93
      $region26: #{tpu_custom_call.1} parent=23 // pred_check_branch
        %160 = sbr.rel (%p158) target = $region28
      $region27: #{tpu_custom_call.1} parent=23 // pred_region
        %s161 = smul.u32 16, %s17
        %p162 = scmp.lt.s32.totalorder %s161, 63
        %s163 = scalar_select %p162, %s161, 63
        %s164 = smul.addr %s163, 4
        %s165 = scalar_lea.vmem %s2, %s164
        %s166 = smul.u32 16, %s17
      $region28: #{tpu_custom_call.1} parent=23 // pred_fallthru
        _
    $region24: #{tpu_custom_call.1} parent=5 // pred_fallthru
      _
    %p167 = scmp.le.s32.totalorder 1, %s9
    %p168 = scmp.lt.s32.totalorder %s9, 5
    %p169 = pnand %p167, %p168
    %p170 = pneg %p169
    // Predicated region
    $region29: #{tpu_custom_call.1} parent=5 // pred_check
      _
    $region30: #{tpu_custom_call.1} parent=5 // pred_check_branch
      %172 = sbr.rel (%p169) target = $region32
    $region31: #{tpu_custom_call.1} parent=5 // pred_region
      %s173 = ssub.s32 %s9, 1
      %p174 = scmp.lt.s32.totalorder %s18, 0
      %s175 = scalar_select %p174, %s18, 0
      %s176 = smul.addr %s175, 8
      %s177 = scalar_lea.vmem %s0, %s176
      %p178 = pneg %p47
      %p179 = pneg %p44
      %p180 = scmp.lt.s32.totalorder %s18, 0
      %s181 = scalar_select %p180, %s18, 0
      %s182 = smul.addr %s181, 8
      %s183 = scalar_lea.vmem %s1, %s182
      %p184 = pneg %p73
      %p185 = pneg %p70
      %s186 = smul.u32 16, %s19
      %p187 = scmp.lt.s32.totalorder %s186, 63
      %s188 = scalar_select %p187, %s186, 63
      %s189 = smul.addr %s188, 4
      %s190 = scalar_lea.vmem %s2, %s189
      %p191 = pneg %p99
      %p192 = pneg %p96
      %p193 = pneg %p125
      %p194 = pneg %p122
      %p195 = scmp.lt.s32.totalorder %s18, 0
      %s196 = scalar_select %p195, %s18, 0
      %s197 = smul.addr %s196, 8
      %s198 = scalar_lea.vmem %s3, %s197
      %p199 = scmp.lt.s32.totalorder %s18, 0
      %s200 = scalar_select %p199, %s18, 0
      %s201 = smul.addr %s200, 8
      %s202 = scalar_lea.vmem %s0, %s201
      %p203 = scmp.lt.s32.totalorder %s18, 0
      %s204 = scalar_select %p203, %s18, 0
      %s205 = smul.addr %s204, 8
      %s206 = scalar_lea.vmem %s1, %s205
      %s207 = smul.u32 16, %s19
      %p208 = scmp.lt.s32.totalorder %s207, 63
      %s209 = scalar_select %p208, %s207, 63
      %s210 = smul.addr %s209, 4
      %s211 = scalar_lea.vmem %s2, %s210
      %s212 = smul.u32 16, %s19
      %p213 = scmp.lt.s32.totalorder %s18, 0
      %s214 = scalar_select %p213, %s18, 0
      %s215 = smul.addr %s214, 8
      %s216 = scalar_lea.vmem %s3, %s215
      %p218 = scmp.eq.s32.totalorder %s19, 0
      // Predicated region
      $region33: #{tpu_custom_call.1} parent=31 // pred_check
        %p219 = pneg %p218
      $region34: #{tpu_custom_call.1} parent=31 // pred_check_branch
        %221 = sbr.rel (%p219) target = $region36
      $region35: #{tpu_custom_call.1} parent=31 // pred_region
        %v222 = vld [vmem:[%s202] sm:$0xff]
        %v223 = vld [vmem:[%s206] sm:$0xff]
        %v224 = vmul.f32 %v222, 14.285714
        %v225 = vpack.c.bf16 %v224, %v224
        %vm226 = vcmask 257024
        %227 = vst.msk [vmem:[#allocation2] sm:$0xf] %vm226, %v225
        %v228 = vmul.f32 %v222, %v223
        %vm229 = vcmask 261120
        %v230 = vsel %vm229, %v228, 0.0
        %231 = vadd.xlane.f32.xlu0 %v230
        %v232 = vpop.xlane.xlu0 %231
        %v233 = vmul.f32 %v232, 14.285714
        %vm234 = vcmask 7168
        %235 = vst.msk [vmem:[#allocation3] sm:$0xff] %vm234, %v233
        %v236 = vsub.f32 %v233, 14.285714
        %v237 = vmul.f32 %v236, 1.442695
        %v238 = vpow.pop %v237
        %239 = vst.msk [vmem:[#allocation5] sm:$0xff] %vm234, %v238
      $region36: #{tpu_custom_call.1} parent=31 // pred_fallthru
        _
      %v240 = vld [vmem:[#allocation2] sm:$0xf]
      %v241 = vld [vmem:[%s211] sm:$0xf]
      %v242 = vld [vmem:[%s211 + $0x4] sm:$0xf]
      %v243 = vld [vmem:[%s211 + $0x8] sm:$0xf]
      %v244 = vld [vmem:[%s211 + $0xc] sm:$0xf]
      %v245 = vld [vmem:[%s211 + $0x10] sm:$0xf]
      %v246 = vld [vmem:[%s211 + $0x14] sm:$0xf]
      %v247 = vld [vmem:[%s211 + $0x18] sm:$0xf]
      %v248 = vld [vmem:[%s211 + $0x1c] sm:$0xf]
      %v249 = vld [vmem:[%s211 + $0x20] sm:$0xf]
      %v250 = vld [vmem:[%s211 + $0x24] sm:$0xf]
      %v251 = vld [vmem:[%s211 + $0x28] sm:$0xf]
      %v252 = vld [vmem:[%s211 + $0x2c] sm:$0xf]
      %v253 = vld [vmem:[%s211 + $0x30] sm:$0xf]
      %v254 = vld [vmem:[%s211 + $0x34] sm:$0xf]
      %v255 = vld [vmem:[%s211 + $0x38] sm:$0xf]
      %v256 = vld [vmem:[%s211 + $0x3c] sm:$0xf]
      %v273 = vunpack.c.l.b16 %v241
      %v274 = vunpack.c.l.b16 %v242
      %v275 = vunpack.c.l.b16 %v243
      %v276 = vunpack.c.l.b16 %v244
      %v277 = vunpack.c.l.b16 %v245
      %v278 = vunpack.c.l.b16 %v246
      %v279 = vunpack.c.l.b16 %v247
      %v280 = vunpack.c.l.b16 %v248
      %v281 = vunpack.c.l.b16 %v249
      %v282 = vunpack.c.l.b16 %v250
      %v283 = vunpack.c.l.b16 %v251
      %v284 = vunpack.c.l.b16 %v252
      %v285 = vunpack.c.l.b16 %v253
      %v286 = vunpack.c.l.b16 %v254
      %v287 = vunpack.c.l.b16 %v255
      %v288 = vunpack.c.l.b16 %v256
      %v289 = vpack.c.b16 %v274, %v273
      %v290 = vpack.c.b16 %v276, %v275
      %v291 = vpack.c.b16 %v278, %v277
      %v292 = vpack.c.b16 %v280, %v279
      %v293 = vpack.c.b16 %v282, %v281
      %v294 = vpack.c.b16 %v284, %v283
      %v295 = vpack.c.b16 %v286, %v285
      %v296 = vpack.c.b16 %v288, %v287
      %vm297 = vcmask 261120
      %v299 = vsel %vm297, %v240, 0
      %v302 = vsel %vm297, %v289, 0
      %v305 = vsel %vm297, %v290, 0
      %v308 = vsel %vm297, %v291, 0
      %v311 = vsel %vm297, %v292, 0
      %v314 = vsel %vm297, %v293, 0
      %v317 = vsel %vm297, %v294, 0
      %v320 = vsel %vm297, %v295, 0
      %v323 = vsel %vm297, %v296, 0
      %325 = vmatprep.subr.bf16.mxu0 0
      %326 = vmatpush1.bf16.xpose.msra.mxu0 %v302
      %327 = vmatprep.subr.bf16.mxu0 0
      %328 = vmatpush1.bf16.xpose.msra.mxu0 %v305
      %329 = vmatprep.subr.bf16.mxu0 0
      %330 = vmatpush1.bf16.xpose.msra.mxu0 %v308
      %331 = vmatprep.subr.bf16.mxu0 0
      %332 = vmatpush1.bf16.xpose.msra.mxu0 %v311
      %333 = vmatprep.subr.bf16.mxu0 0
      %334 = vmatpush1.bf16.xpose.msra.mxu0 %v314
      %335 = vmatprep.subr.bf16.mxu0 0
      %336 = vmatpush1.bf16.xpose.msra.mxu0 %v317
      %337 = vmatprep.subr.bf16.mxu0 0
      %338 = vmatpush1.bf16.xpose.msra.mxu0 %v320
      %339 = vmatprep.subr.bf16.mxu0 0
      %340 = vmatpush1.bf16.xpose.msra.mxu0 %v323
      %341 = vmatprep.subr.bf16.mxu0 0
      %342 = vmatpush1.bf16.xpose.msra.mxu0 0
      %343 = vmatprep.subr.bf16.mxu0 0
      %344 = vmatpush1.bf16.xpose.msra.mxu0 0
      %345 = vmatprep.subr.bf16.mxu0 0
      %346 = vmatpush1.bf16.xpose.msra.mxu0 0
      %347 = vmatprep.subr.bf16.mxu0 0
      %348 = vmatpush1.bf16.xpose.msra.mxu0 0
      %349 = vmatprep.subr.bf16.mxu0 0
      %350 = vmatpush1.bf16.xpose.msra.mxu0 0
      %351 = vmatprep.subr.bf16.mxu0 0
      %352 = vmatpush1.bf16.xpose.msra.mxu0 0
      %353 = vmatprep.subr.bf16.mxu0 0
      %354 = vmatpush1.bf16.xpose.msra.mxu0 0
      %355 = vmatprep.subr.bf16.mxu0 0
      %356 = vmatpush1.bf16.xpose.msra.mxu0 0
      %357 = vmatprep.mubr.bf16.mxu0 0
      %358 = vmatmul.mubr.bf16.gmra.mrb[0].mxu0 %v299
      %v359 = vpop.f32.mrb[0].mxu0
      %v360 = vadd.f32 0.0, %v359
      %v361 = vpop.f32.mrb[0].mxu0
      %v362 = vpop.f32.mrb[0].mxu0
      %v363 = vpop.f32.mrb[0].mxu0
      %364 = vdwg.mxu0
      %v365 = vld [vmem:[#allocation5] sm:$0xff]
      %v366 = vsub.f32 %v360, 14.285714
      %v367 = vmul.f32 %v366, 1.442695
      %v368 = vpow.pop %v367
      %369 = vadd.xlane.f32.xlu0 %v368
      %v370 = vpop.xlane.xlu0 %369
      %v371 = vadd.f32 %v365, %v370
      %vm372 = vcmask 7168
      %373 = vst.msk [vmem:[#allocation5] sm:$0xff] %vm372, %v371
      %p374 = scmp.eq.s32.totalorder %s19, 3
      // Predicated region
      $region37: #{tpu_custom_call.1} parent=31 // pred_check
        %p375 = pneg %p374
      $region38: #{tpu_custom_call.1} parent=31 // pred_check_branch
        %377 = sbr.rel (%p375) target = $region40
      $region39: #{tpu_custom_call.1} parent=31 // pred_region
        %v378 = vld [vmem:[#allocation5] sm:$0xff]
        %v379 = vlog2.pop %v378
        %v380 = vmul.f32 %v379, 0.6931472
        %v381 = vadd.f32 %v380, 14.285714
        %v382 = vld [vmem:[#allocation3] sm:$0xff]
        %v383 = vsub.f32 %v381, %v382
        %384 = vst.msk [vmem:[%s216] sm:$0xff] %vm372, %v383
      $region40: #{tpu_custom_call.1} parent=31 // pred_fallthru
        _
      %p385 = scmp.lt.s32.totalorder %s18, 0
      %s386 = scalar_select %p385, %s18, 0
      %s387 = smul.addr %s386, 8
      %s388 = scalar_lea.vmem %s3, %s387
      // Predicated region
      $region41: #{tpu_custom_call.1} parent=31 // pred_check
        %p389 = pneg %p122
      $region42: #{tpu_custom_call.1} parent=31 // pred_check_branch
        %391 = sbr.rel (%p389) target = $region44
      $region43: #{tpu_custom_call.1} parent=31 // pred_region
        _
      $region44: #{tpu_custom_call.1} parent=31 // pred_fallthru
        _
      // Predicated region
      $region45: #{tpu_custom_call.1} parent=31 // pred_check
        %p392 = pneg %p122
      $region46: #{tpu_custom_call.1} parent=31 // pred_check_branch
        %394 = sbr.rel (%p392) target = $region48
      $region47: #{tpu_custom_call.1} parent=31 // pred_region
        %p395 = scmp.lt.s32.totalorder %s18, 0
        %s396 = scalar_select %p395, %s18, 0
        %s397 = smul.addr %s396, 8
        %s398 = scalar_lea.vmem %s3, %s397
      $region48: #{tpu_custom_call.1} parent=31 // pred_fallthru
        _
    $region32: #{tpu_custom_call.1} parent=5 // pred_fallthru
      _
    %p399 = scmp.le.s32.totalorder 2, %s9
    // Predicated region
    $region49: #{tpu_custom_call.1} parent=5 // pred_check
      %p400 = pneg %p399
    $region50: #{tpu_custom_call.1} parent=5 // pred_check_branch
      %402 = sbr.rel (%p400) target = $region52
    $region51: #{tpu_custom_call.1} parent=5 // pred_region
      %s403 = ssub.s32 %s9, 2
    $region52: #{tpu_custom_call.1} parent=5 // pred_fallthru
      _
  $region6: #{tpu_custom_call.1} parent=0 // loop_footer
    %s13 = sadd.s32 1, %s9
  $region7: #{tpu_custom_call.1} parent=0 // loop_footer_branch
    %8 = sbr.rel target = $region3
  $region8: #{tpu_custom_call.1} parent=0 // loop_exit
    _

</llo_original>
